<compile_context>
chip_gen: v6e
topology: v6e:2x2x1
jax: 0.10.0
libtpu: 0.0.40
codegen_flags: <defaults>
</compile_context>

<pallas_src>
import jax
import jax.numpy as jnp
from jax.experimental import pallas as pl
from jax.experimental.pallas import tpu as pltpu


def _make_verlet_kernel(n_hidden):
    """Builds a kernel for: first linear (bias folded), n_hidden Verlet blocks,
    final linear.  All tensors are (features, batch_tile) so the lane axis
    carries the batch."""

    def kernel(*refs):
        act = jnp.tanh
        xT_ref, w0_ref = refs[0], refs[1]
        hidden = refs[2:2 + 3 * n_hidden]
        w_last_ref, b_last_ref = refs[2 + 3 * n_hidden], refs[3 + 3 * n_hidden]
        oT_ref = refs[4 + 3 * n_hidden]

        # First layer: bias folded into w0 (ones row appended to xT) -> one dot.
        out = act(jnp.dot(w0_ref[...], xT_ref[...],
                          preferred_element_type=jnp.float32))

        # Hidden "Verlet" blocks; first z = -tanh(t) folds away the zeros init.
        z = None
        for li in range(n_hidden):
            w_ref, wt_ref, b_ref = hidden[3 * li:3 * li + 3]
            w = w_ref[...]
            wt = wt_ref[...]
            # Hoist the (h,1)->(h,tile_b) lane broadcast once; it is reused by
            # both adds below (JAX does not CSE broadcast_in_dim).
            b = jnp.broadcast_to(b_ref[...], out.shape)
            shortcut = out
            # transpose(layer, out) = out @ W + b   (transposed: W^T @ out + b)
            t = jnp.dot(wt, out, preferred_element_type=jnp.float32) + b
            z = -act(t) if z is None else z - act(t)
            # layer(z) = z @ W^T + b                (transposed: W @ z + b)
            o2 = jnp.dot(w, z, preferred_element_type=jnp.float32) + b
            out = shortcut + act(o2)

        # final linear: W_last @ out + b_last  (lane-dense store)
        oT_ref[...] = (jnp.dot(w_last_ref[...], out,
                               preferred_element_type=jnp.float32)
                       + b_last_ref[...]).astype(oT_ref.dtype)

    return kernel


def _choose_tile_b(B, *, max_tile=512, lane=128):
    """Generation-aware batch tile.

    * As large as possible (each grid step costs ~0.35 us of fixed overhead,
      which dwarfs the per-tile compute at h=32 / d_in=4).
    * Capped at max_tile=512 so the (h, tile_b) f32 live set (out, shortcut, z,
      t/o2) stays within the 64-vreg file (no spills).
    * Aims for n_tiles >= 2 whenever B allows, so the 'parallel' batch-tile
      axis feeds both v7x TensorCores; on v5e/v6e extra tiles are just a short
      sequential loop.
    """
    B_pad_min = ((B + lane - 1) // lane) * lane
    if B_pad_min <= lane:
        return lane
    half = ((B_pad_min // 2) + lane - 1) // lane * lane   # ~B/2 per tile
    return int(max(lane, min(half, max_tile)))


def verlet_net_pallas(x, params, *, tile_b=None):
    """params = [(W0,b0), (W1,b1), ..., (W_last,b_last)] in PyTorch layout.

    x: (B, d_in) float32.  Returns (B, d_out) float32.
    """
    assert len(params) >= 2
    (w0, b0) = params[0]
    (w_last, b_last) = params[-1]
    hidden_params = params[1:-1]
    B, d_in = x.shape
    h = w0.shape[0]
    d_out = w_last.shape[0]
    for (w, _) in hidden_params:
        assert w.shape == (h, h), "hidden layers must share width"

    if tile_b is None:
        tile_b = _choose_tile_b(B)
    n_tiles = pl.cdiv(B, tile_b)
    B_pad = n_tiles * tile_b

    # Batch on lanes.  Fold b0 into the first matmul: append a ones column to x
    # and b0 as an extra column of w0.  Single fused pad (no zeros + DUS).
    x_aug = jnp.concatenate([x, jnp.ones((B, 1), x.dtype)], axis=1)   # (B, d_in+1)
    x_aug = jnp.pad(x_aug, ((0, B_pad - B), (0, 0)))                  # pad batch rows
    xT = x_aug.T                                                      # (d_in+1, B_pad)
    w0_aug = jnp.concatenate([w0, b0.reshape(h, 1)], axis=1)          # (h, d_in+1)

    rep = lambda i: (0, 0)  # weights / biases replicated across batch tiles

    # xT input: deepen pipelining only when there are many batch tiles (the
    # per-step compute is tiny, so DMA issue latency can be exposed at depth 2).
    if n_tiles >= 3:
        x_spec = pl.BlockSpec((d_in + 1, tile_b), lambda i: (0, i),
                              pipeline_mode=pl.Buffered(3))
    else:
        x_spec = pl.BlockSpec((d_in + 1, tile_b), lambda i: (0, i))

    inputs = [xT, w0_aug]
    in_specs = [x_spec, pl.BlockSpec(w0_aug.shape, rep)]

    # Host-side pre-transposes: both orientations (W and W^T) consumed per
    # hidden Verlet block; column-vector biases broadcast along lanes (batch).
    for (w, b) in hidden_params:
        wt = w.T
        bc = b.reshape(h, 1)
        inputs += [w, wt, bc]
        in_specs += [pl.BlockSpec(w.shape, rep),
                     pl.BlockSpec(wt.shape, rep),
                     pl.BlockSpec((h, 1), rep)]

    b_last_c = b_last.reshape(d_out, 1)
    inputs += [w_last, b_last_c]
    in_specs += [pl.BlockSpec(w_last.shape, rep),
                 pl.BlockSpec((d_out, 1), rep)]

    out_specs = pl.BlockSpec((d_out, tile_b), lambda i: (0, i))   # lane-dense output

    outT = pl.pallas_call(
        _make_verlet_kernel(len(hidden_params)),
        out_shape=jax.ShapeDtypeStruct((d_out, B_pad), jnp.float32),
        grid_spec=pltpu.PrefetchScalarGridSpec(
            num_scalar_prefetch=0,
            grid=(n_tiles,),
            in_specs=in_specs,
            out_specs=out_specs,
        ),
        compiler_params=pltpu.CompilerParams(
            dimension_semantics=("parallel",),   # megacore: shard batch tiles on v7x
        ),
    )(*inputs)

    return outT[:, :B].T


def verlet_net_reference(x, params):
    """Pure-JAX reference mirroring the PyTorch forward exactly."""
    act = jnp.tanh
    (w0, b0) = params[0]
    out = act(x @ w0.T + b0)
    z = jnp.zeros_like(out)
    for (w, b) in params[1:-1]:
        shortcut = out
        out = out @ w + b          # F.linear(out, W.t(), b)
        z = z - act(out)
        out = z @ w.T + b          # layer(z)
        out = shortcut + act(out)
    (wl, bl) = params[-1]
    return out @ wl.T + bl


def init_params(key, layers):
    """Deterministic PyTorch-Linear-style init: U(-1/sqrt(fan_in), +1/sqrt(fan_in))."""
    params = []
    for i in range(len(layers) - 1):
        fan_in, fan_out = layers[i], layers[i + 1]
        key, kw, kb = jax.random.split(key, 3)
        bound = 1.0 / jnp.sqrt(fan_in)
        w = jax.random.uniform(kw, (fan_out, fan_in), jnp.float32, -bound, bound)
        b = jax.random.uniform(kb, (fan_out,), jnp.float32, -bound, bound)
        params.append((w, b))
    return params


if __name__ == "__main__":
    # layers = [d_in, hidden, hidden, hidden, d_out]
    layers = [4, 32, 32, 32, 2]
    batch = 512          # auto tile_b=256 -> two batch tiles -> 2 parallel grid steps

    key = jax.random.PRNGKey(0)
    key, kx = jax.random.split(key)
    x = jax.random.normal(kx, (batch, layers[0]), jnp.float32)
    params = init_params(key, layers)

    out = jax.block_until_ready(verlet_net_pallas(x, params))
    ref = verlet_net_reference(x, params)

    assert out.shape == (batch, layers[-1])
    assert jnp.allclose(out, ref, atol=1e-4, rtol=1e-4), "mismatch vs reference"

    print("KERNEL_OK")
</pallas_src>

<mosaic_0001>
module attributes {stable_mosaic.version = 11 : i64} {
  func.func @kernel(%arg0: i32, %arg1: memref<5x256xf32, #tpu.memory_space<vmem>>, %arg2: memref<32x5xf32, #tpu.memory_space<vmem>>, %arg3: memref<32x32xf32, #tpu.memory_space<vmem>>, %arg4: memref<32x32xf32, #tpu.memory_space<vmem>>, %arg5: memref<32x1xf32, #tpu.memory_space<vmem>>, %arg6: memref<32x32xf32, #tpu.memory_space<vmem>>, %arg7: memref<32x32xf32, #tpu.memory_space<vmem>>, %arg8: memref<32x1xf32, #tpu.memory_space<vmem>>, %arg9: memref<2x32xf32, #tpu.memory_space<vmem>>, %arg10: memref<2x1xf32, #tpu.memory_space<vmem>>, %arg11: memref<2x256xf32, #tpu.memory_space<vmem>>) attributes {dimension_semantics = [#tpu.dimension_semantics<parallel>], iteration_bounds = array<i64: 2>, scalar_prefetch = 0 : i64, scratch_operands = 0 : i64, tpu.core_type = #tpu.core_type<tc>, window_params = [{transform_indices = @transform_0, window_bounds = array<i64: 5, 256>}, {pipeline_mode = #tpu.pipeline_mode<synchronous>, transform_indices = @transform_1, window_bounds = array<i64: 32, 5>}, {pipeline_mode = #tpu.pipeline_mode<synchronous>, transform_indices = @transform_2, window_bounds = array<i64: 32, 32>}, {pipeline_mode = #tpu.pipeline_mode<synchronous>, transform_indices = @transform_3, window_bounds = array<i64: 32, 32>}, {pipeline_mode = #tpu.pipeline_mode<synchronous>, transform_indices = @transform_4, window_bounds = array<i64: 32, 1>}, {pipeline_mode = #tpu.pipeline_mode<synchronous>, transform_indices = @transform_5, window_bounds = array<i64: 32, 32>}, {pipeline_mode = #tpu.pipeline_mode<synchronous>, transform_indices = @transform_6, window_bounds = array<i64: 32, 32>}, {pipeline_mode = #tpu.pipeline_mode<synchronous>, transform_indices = @transform_7, window_bounds = array<i64: 32, 1>}, {pipeline_mode = #tpu.pipeline_mode<synchronous>, transform_indices = @transform_8, window_bounds = array<i64: 2, 32>}, {pipeline_mode = #tpu.pipeline_mode<synchronous>, transform_indices = @transform_9, window_bounds = array<i64: 2, 1>}, {transform_indices = @transform_10, window_bounds = array<i64: 2, 256>}]} {
    %c0 = arith.constant 0 : index
    %c0_0 = arith.constant 0 : index
    %0 = vector.load %arg2[%c0, %c0_0] : memref<32x5xf32, #tpu.memory_space<vmem>>, vector<32x5xf32>
    %c0_1 = arith.constant 0 : index
    %c0_2 = arith.constant 0 : index
    %1 = vector.load %arg1[%c0_1, %c0_2] : memref<5x256xf32, #tpu.memory_space<vmem>>, vector<5x256xf32>
    %cst = arith.constant dense<0.000000e+00> : vector<32x256xf32>
    %2 = tpu.matmul %0, %1, %cst {dimension_numbers = #tpu.dot_dimension_numbers<[1], [0], [0], [1], [0, 0, 1, 1], [], []>} : vector<32x5xf32>, vector<5x256xf32>, vector<32x256xf32> -> vector<32x256xf32>
    %3 = math.tanh %2 : vector<32x256xf32>
    %c0_3 = arith.constant 0 : index
    %c0_4 = arith.constant 0 : index
    %4 = vector.load %arg3[%c0_3, %c0_4] : memref<32x32xf32, #tpu.memory_space<vmem>>, vector<32x32xf32>
    %c0_5 = arith.constant 0 : index
    %c0_6 = arith.constant 0 : index
    %5 = vector.load %arg4[%c0_5, %c0_6] : memref<32x32xf32, #tpu.memory_space<vmem>>, vector<32x32xf32>
    %c0_7 = arith.constant 0 : index
    %c0_8 = arith.constant 0 : index
    %6 = vector.load %arg5[%c0_7, %c0_8] : memref<32x1xf32, #tpu.memory_space<vmem>>, vector<32x1xf32>
    %7 = vector.shape_cast %6 : vector<32x1xf32> to vector<32x1xf32>
    %8 = vector.broadcast %7 : vector<32x1xf32> to vector<32x256xf32>
    %cst_9 = arith.constant dense<0.000000e+00> : vector<32x256xf32>
    %9 = tpu.matmul %5, %3, %cst_9 {dimension_numbers = #tpu.dot_dimension_numbers<[1], [0], [0], [1], [0, 0, 1, 1], [], []>} : vector<32x32xf32>, vector<32x256xf32>, vector<32x256xf32> -> vector<32x256xf32>
    %10 = arith.addf %9, %8 : vector<32x256xf32>
    %11 = math.tanh %10 : vector<32x256xf32>
    %cst_10 = arith.constant 0.000000e+00 : f32
    %12 = vector.broadcast %cst_10 : f32 to vector<32x256xf32>
    %13 = arith.subf %12, %11 : vector<32x256xf32>
    %cst_11 = arith.constant dense<0.000000e+00> : vector<32x256xf32>
    %14 = tpu.matmul %4, %13, %cst_11 {dimension_numbers = #tpu.dot_dimension_numbers<[1], [0], [0], [1], [0, 0, 1, 1], [], []>} : vector<32x32xf32>, vector<32x256xf32>, vector<32x256xf32> -> vector<32x256xf32>
    %15 = arith.addf %14, %8 : vector<32x256xf32>
    %16 = math.tanh %15 : vector<32x256xf32>
    %17 = arith.addf %3, %16 : vector<32x256xf32>
    %c0_12 = arith.constant 0 : index
    %c0_13 = arith.constant 0 : index
    %18 = vector.load %arg6[%c0_12, %c0_13] : memref<32x32xf32, #tpu.memory_space<vmem>>, vector<32x32xf32>
    %c0_14 = arith.constant 0 : index
    %c0_15 = arith.constant 0 : index
    %19 = vector.load %arg7[%c0_14, %c0_15] : memref<32x32xf32, #tpu.memory_space<vmem>>, vector<32x32xf32>
    %c0_16 = arith.constant 0 : index
    %c0_17 = arith.constant 0 : index
    %20 = vector.load %arg8[%c0_16, %c0_17] : memref<32x1xf32, #tpu.memory_space<vmem>>, vector<32x1xf32>
    %21 = vector.shape_cast %20 : vector<32x1xf32> to vector<32x1xf32>
    %22 = vector.broadcast %21 : vector<32x1xf32> to vector<32x256xf32>
    %cst_18 = arith.constant dense<0.000000e+00> : vector<32x256xf32>
    %23 = tpu.matmul %19, %17, %cst_18 {dimension_numbers = #tpu.dot_dimension_numbers<[1], [0], [0], [1], [0, 0, 1, 1], [], []>} : vector<32x32xf32>, vector<32x256xf32>, vector<32x256xf32> -> vector<32x256xf32>
    %24 = arith.addf %23, %22 : vector<32x256xf32>
    %25 = math.tanh %24 : vector<32x256xf32>
    %26 = arith.subf %13, %25 : vector<32x256xf32>
    %cst_19 = arith.constant dense<0.000000e+00> : vector<32x256xf32>
    %27 = tpu.matmul %18, %26, %cst_19 {dimension_numbers = #tpu.dot_dimension_numbers<[1], [0], [0], [1], [0, 0, 1, 1], [], []>} : vector<32x32xf32>, vector<32x256xf32>, vector<32x256xf32> -> vector<32x256xf32>
    %28 = arith.addf %27, %22 : vector<32x256xf32>
    %29 = math.tanh %28 : vector<32x256xf32>
    %30 = arith.addf %17, %29 : vector<32x256xf32>
    %c0_20 = arith.constant 0 : index
    %c0_21 = arith.constant 0 : index
    %31 = vector.load %arg9[%c0_20, %c0_21] : memref<2x32xf32, #tpu.memory_space<vmem>>, vector<2x32xf32>
    %cst_22 = arith.constant dense<0.000000e+00> : vector<2x256xf32>
    %32 = tpu.matmul %31, %30, %cst_22 {dimension_numbers = #tpu.dot_dimension_numbers<[1], [0], [0], [1], [0, 0, 1, 1], [], []>} : vector<2x32xf32>, vector<32x256xf32>, vector<2x256xf32> -> vector<2x256xf32>
    %c0_23 = arith.constant 0 : index
    %c0_24 = arith.constant 0 : index
    %33 = vector.load %arg10[%c0_23, %c0_24] : memref<2x1xf32, #tpu.memory_space<vmem>>, vector<2x1xf32>
    %34 = vector.broadcast %33 : vector<2x1xf32> to vector<2x256xf32>
    %35 = arith.addf %32, %34 : vector<2x256xf32>
    %c0_25 = arith.constant 0 : index
    %c0_26 = arith.constant 0 : index
    %36 = vector.load %arg11[%c0_25, %c0_26] : memref<2x256xf32, #tpu.memory_space<vmem>>, vector<2x256xf32>
    tpu.vector_store %arg11[%c0_25, %c0_26], %35 {strides = array<i32>} : memref<2x256xf32, #tpu.memory_space<vmem>>, vector<2x256xf32>,
    return
  }
  func.func @transform_0(%arg0: i32) -> (i32, i32) {
    %c0_i32 = arith.constant 0 : i32
    %c0_i32_0 = arith.constant 0 : i32
    return %c0_i32, %arg0 : i32, i32
  }
  func.func @transform_1(%arg0: i32) -> (i32, i32) {
    %c0_i32 = arith.constant 0 : i32
    %c0_i32_0 = arith.constant 0 : i32
    %c0_i32_1 = arith.constant 0 : i32
    return %c0_i32, %c0_i32_0 : i32, i32
  }
  func.func @transform_2(%arg0: i32) -> (i32, i32) {
    %c0_i32 = arith.constant 0 : i32
    %c0_i32_0 = arith.constant 0 : i32
    %c0_i32_1 = arith.constant 0 : i32
    return %c0_i32, %c0_i32_0 : i32, i32
  }
  func.func @transform_3(%arg0: i32) -> (i32, i32) {
    %c0_i32 = arith.constant 0 : i32
    %c0_i32_0 = arith.constant 0 : i32
    %c0_i32_1 = arith.constant 0 : i32
    return %c0_i32, %c0_i32_0 : i32, i32
  }
  func.func @transform_4(%arg0: i32) -> (i32, i32) {
    %c0_i32 = arith.constant 0 : i32
    %c0_i32_0 = arith.constant 0 : i32
    %c0_i32_1 = arith.constant 0 : i32
    return %c0_i32, %c0_i32_0 : i32, i32
  }
  func.func @transform_5(%arg0: i32) -> (i32, i32) {
    %c0_i32 = arith.constant 0 : i32
    %c0_i32_0 = arith.constant 0 : i32
    %c0_i32_1 = arith.constant 0 : i32
    return %c0_i32, %c0_i32_0 : i32, i32
  }
  func.func @transform_6(%arg0: i32) -> (i32, i32) {
    %c0_i32 = arith.constant 0 : i32
    %c0_i32_0 = arith.constant 0 : i32
    %c0_i32_1 = arith.constant 0 : i32
    return %c0_i32, %c0_i32_0 : i32, i32
  }
  func.func @transform_7(%arg0: i32) -> (i32, i32) {
    %c0_i32 = arith.constant 0 : i32
    %c0_i32_0 = arith.constant 0 : i32
    %c0_i32_1 = arith.constant 0 : i32
    return %c0_i32, %c0_i32_0 : i32, i32
  }
  func.func @transform_8(%arg0: i32) -> (i32, i32) {
    %c0_i32 = arith.constant 0 : i32
    %c0_i32_0 = arith.constant 0 : i32
    %c0_i32_1 = arith.constant 0 : i32
    return %c0_i32, %c0_i32_0 : i32, i32
  }
  func.func @transform_9(%arg0: i32) -> (i32, i32) {
    %c0_i32 = arith.constant 0 : i32
    %c0_i32_0 = arith.constant 0 : i32
    %c0_i32_1 = arith.constant 0 : i32
    return %c0_i32, %c0_i32_0 : i32, i32
  }
  func.func @transform_10(%arg0: i32) -> (i32, i32) {
    %c0_i32 = arith.constant 0 : i32
    %c0_i32_0 = arith.constant 0 : i32
    return %c0_i32, %arg0 : i32, i32
  }
}

</mosaic_0001>

<llo_original>
// kernel: tpu_custom_call.1
$region0: #{tpu_custom_call.1}
  #allocation0 [shape = 'u32[]', space=smem, size = 0x4, offset = 0x4, fixed_abs, tag = 'smem constant byte address 0x4 - core index']
  #allocation1 [shape = 'u32[144,128]{1,0:T(1,128)}', space=vmem, size = 0x12000, scoped, tag = 'internal scratch']
  %s0 = inlined_call_operand.vmem [shape: f32[5,512], index: 0, kind: input, shape index: {}]
  %s1 = inlined_call_operand.vmem [shape: f32[32,5], index: 1, kind: input, shape index: {}]
  %s2 = inlined_call_operand.vmem [shape: f32[32,32], index: 2, kind: input, shape index: {}]
  %s3 = inlined_call_operand.vmem [shape: f32[32,32], index: 3, kind: input, shape index: {}]
  %s4 = inlined_call_operand.vmem [shape: f32[32,1], index: 4, kind: input, shape index: {}]
  %s5 = inlined_call_operand.hbm [shape: f32[32,32], index: 5, kind: input, shape index: {}]
  %s6 = inlined_call_operand.hbm [shape: f32[32,32], index: 6, kind: input, shape index: {}]
  %s7 = inlined_call_operand.vmem [shape: f32[32,1], index: 7, kind: input, shape index: {}]
  %s8 = inlined_call_operand.vmem [shape: f32[2,32], index: 8, kind: input, shape index: {}]
  %s9 = inlined_call_operand.vmem [shape: f32[2,1], index: 9, kind: input, shape index: {}]
  %s10 = inlined_call_operand.hbm [shape: f32[2,512], index: 10, kind: output, shape index: {}]
  %s11 = sld [smem:[#allocation0]]
  $region81: #{tpu_custom_call.1} parent=0
    _
  %s13 = ssub.s32 1, %s11
  %s14 = scalar_select 0, %s13, %s11
  $region1: #{tpu_custom_call.1} parent=0
    #allocation2 [shape = 'u8[16384]{0}', space=vmem, size = 0x4000, scoped, tag = 'input window, operand 5, single buffered']
    #allocation3 [shape = 's32[2]{0}', space=sflag, size = 0x8, scoped, tag = 'scoped memory for tpu_custom_call.1']
    #allocation4 [shape = 's32[2]{0}', space=sflag, size = 0x8, scoped, tag = 'scoped memory for tpu_custom_call.1']
    #allocation5 [shape = 'u8[16384]{0}', space=vmem, size = 0x4000, scoped, tag = 'input window, operand 6, single buffered']
    #allocation6 [shape = 's32[1]{0}', space=sflag, size = 0x4, scoped, tag = 'scoped memory for tpu_custom_call.1']
    #allocation7 [shape = 'u8[4096]{0}', space=vmem, size = 0x1000, scoped, tag = 'output window, operand 0']
    %15 = vsyncpa [#allocation3], 0
    %16 = vsyncpa [#allocation6], 0
    %17 = vsyncpa [#allocation4], 0
    %s18 = scalar_lea.sflag [#allocation4], 1
    %19 = vsyncpa %s18, 0
    loop: start=0, step=1, limit=4
    $region2: #{tpu_custom_call.1} parent=1 // loop_pre_header
      _
    $region3: #{tpu_custom_call.1} parent=1 // loop_header
      %s21 = sphi 0, %s25
      %p22 = scmp.ge.s32.totalorder %s21, 4
      %s31 = sphi 0, %s33
      %s34 = sphi 0, %s31
      %s35 = sphi 0, %s34
      %s51 = sphi 0, %s35
      %s55 = sphi 0, %s55
      %s57 = sphi 0, %s55
      %s58 = sphi 0, %s57
      %s72 = sphi 0, %s58
      %s76 = sphi 0, %s76
      %s78 = sphi 0, %s76
      %s79 = sphi 0, %s78
      %s93 = sphi 0, %s79
      %s97 = sphi 0, %s97
      %s99 = sphi 0, %s97
      %s100 = sphi 0, %s99
      %s114 = sphi 0, %s100
      %s118 = sphi 0, %s118
      %s120 = sphi 0, %s118
      %s121 = sphi 0, %s120
      %s135 = sphi 0, %s121
      %s139 = sphi 0, %s139
      %s141 = sphi 0, %s139
      %s142 = sphi 0, %s141
      %s156 = sphi 0, %s142
      %s160 = sphi 0, %s160
      %s162 = sphi 0, %s160
      %s163 = sphi 0, %s162
      %s177 = sphi 0, %s163
      %s181 = sphi 0, %s181
      %s183 = sphi 0, %s181
      %s184 = sphi 0, %s183
      %s198 = sphi 0, %s184
      %s202 = sphi 0, %s202
      %s204 = sphi 0, %s202
      %s205 = sphi 0, %s204
      %s219 = sphi 0, %s205
      %s223 = sphi 0, %s223
      %s225 = sphi 0, %s223
      %s226 = sphi 0, %s225
      %s240 = sphi 0, %s226
      %s246 = sphi 0, %s248
      %s249 = sphi 0, %s246
      %s250 = sphi 0, %s249
      %s266 = sphi 0, %s250
    $region4: #{tpu_custom_call.1} parent=1 // loop_header_branch
      %24 = sbr.rel (%p22) target = $region8
    $region5: #{tpu_custom_call.1} parent=1 // loop_body
      %s26 = ssub.s32 %s21, 1
      %s27 = ssub.s32 %s21, 2
      %s28 = sadd.s32 %s21, 1
      %s29 = ssub.s32 %s21, %s28
      %p30 = scmp.eq.s32.totalorder %s29, 0
      %s32 = sadd.s32 %s31, 1
      %s33 = scalar_select %p30, %s31, %s32
      %p36 = pneg %p30
      %p37 = scmp.eq.s32.totalorder %s21, 1
      %p38 = por %p36, %p37
      %p39 = scmp.ne.s32.totalorder %s31, %s34
      %p40 = scmp.eq.s32.totalorder %s21, 0
      %p41 = por %p39, %p40
      %p42 = scmp.ne.s32.totalorder %s31, %s34
      %p43 = scmp.eq.s32.totalorder %s26, 1
      %p44 = por %p42, %p43
      %p45 = scmp.ne.s32.totalorder %s34, %s35
      %p46 = scmp.eq.s32.totalorder %s26, 0
      %p47 = por %p45, %p46
      %p48 = scmp.ne.s32.totalorder %s34, %s35
      %p49 = scmp.eq.s32.totalorder %s27, 1
      %p50 = por %p48, %p49
      %p52 = scmp.ne.s32.totalorder %s35, %s51
      %p53 = scmp.eq.s32.totalorder %s27, 0
      %p54 = por %p52, %p53
      %s56 = sadd.s32 %s55, 1
      %p59 = scmp.eq.s32.totalorder %s21, 1
      %p60 = scmp.ne.s32.totalorder %s55, %s57
      %p61 = scmp.eq.s32.totalorder %s21, 0
      %p62 = por %p60, %p61
      %p63 = scmp.ne.s32.totalorder %s55, %s57
      %p64 = scmp.eq.s32.totalorder %s26, 1
      %p65 = por %p63, %p64
      %p66 = scmp.ne.s32.totalorder %s57, %s58
      %p67 = scmp.eq.s32.totalorder %s26, 0
      %p68 = por %p66, %p67
      %p69 = scmp.ne.s32.totalorder %s57, %s58
      %p70 = scmp.eq.s32.totalorder %s27, 1
      %p71 = por %p69, %p70
      %p73 = scmp.ne.s32.totalorder %s58, %s72
      %p74 = scmp.eq.s32.totalorder %s27, 0
      %p75 = por %p73, %p74
      %s77 = sadd.s32 %s76, 1
      %p80 = scmp.eq.s32.totalorder %s21, 1
      %p81 = scmp.ne.s32.totalorder %s76, %s78
      %p82 = scmp.eq.s32.totalorder %s21, 0
      %p83 = por %p81, %p82
      %p84 = scmp.ne.s32.totalorder %s76, %s78
      %p85 = scmp.eq.s32.totalorder %s26, 1
      %p86 = por %p84, %p85
      %p87 = scmp.ne.s32.totalorder %s78, %s79
      %p88 = scmp.eq.s32.totalorder %s26, 0
      %p89 = por %p87, %p88
      %p90 = scmp.ne.s32.totalorder %s78, %s79
      %p91 = scmp.eq.s32.totalorder %s27, 1
      %p92 = por %p90, %p91
      %p94 = scmp.ne.s32.totalorder %s79, %s93
      %p95 = scmp.eq.s32.totalorder %s27, 0
      %p96 = por %p94, %p95
      %s98 = sadd.s32 %s97, 1
      %p101 = scmp.eq.s32.totalorder %s21, 1
      %p102 = scmp.ne.s32.totalorder %s97, %s99
      %p103 = scmp.eq.s32.totalorder %s21, 0
      %p104 = por %p102, %p103
      %p105 = scmp.ne.s32.totalorder %s97, %s99
      %p106 = scmp.eq.s32.totalorder %s26, 1
      %p107 = por %p105, %p106
      %p108 = scmp.ne.s32.totalorder %s99, %s100
      %p109 = scmp.eq.s32.totalorder %s26, 0
      %p110 = por %p108, %p109
      %p111 = scmp.ne.s32.totalorder %s99, %s100
      %p112 = scmp.eq.s32.totalorder %s27, 1
      %p113 = por %p111, %p112
      %p115 = scmp.ne.s32.totalorder %s100, %s114
      %p116 = scmp.eq.s32.totalorder %s27, 0
      %p117 = por %p115, %p116
      %s119 = sadd.s32 %s118, 1
      %p122 = scmp.eq.s32.totalorder %s21, 1
      %p123 = scmp.ne.s32.totalorder %s118, %s120
      %p124 = scmp.eq.s32.totalorder %s21, 0
      %p125 = por %p123, %p124
      %p126 = scmp.ne.s32.totalorder %s118, %s120
      %p127 = scmp.eq.s32.totalorder %s26, 1
      %p128 = por %p126, %p127
      %p129 = scmp.ne.s32.totalorder %s120, %s121
      %p130 = scmp.eq.s32.totalorder %s26, 0
      %p131 = por %p129, %p130
      %p132 = scmp.ne.s32.totalorder %s120, %s121
      %p133 = scmp.eq.s32.totalorder %s27, 1
      %p134 = por %p132, %p133
      %p136 = scmp.ne.s32.totalorder %s121, %s135
      %p137 = scmp.eq.s32.totalorder %s27, 0
      %p138 = por %p136, %p137
      %s140 = sadd.s32 %s139, 1
      %p143 = scmp.eq.s32.totalorder %s21, 1
      %p144 = scmp.ne.s32.totalorder %s139, %s141
      %p145 = scmp.eq.s32.totalorder %s21, 0
      %p146 = por %p144, %p145
      %p147 = scmp.ne.s32.totalorder %s139, %s141
      %p148 = scmp.eq.s32.totalorder %s26, 1
      %p149 = por %p147, %p148
      %p150 = scmp.ne.s32.totalorder %s141, %s142
      %p151 = scmp.eq.s32.totalorder %s26, 0
      %p152 = por %p150, %p151
      %p153 = scmp.ne.s32.totalorder %s141, %s142
      %p154 = scmp.eq.s32.totalorder %s27, 1
      %p155 = por %p153, %p154
      %p157 = scmp.ne.s32.totalorder %s142, %s156
      %p158 = scmp.eq.s32.totalorder %s27, 0
      %p159 = por %p157, %p158
      %s161 = sadd.s32 %s160, 1
      %p164 = scmp.eq.s32.totalorder %s21, 1
      %p165 = scmp.ne.s32.totalorder %s160, %s162
      %p166 = scmp.eq.s32.totalorder %s21, 0
      %p167 = por %p165, %p166
      %p168 = scmp.ne.s32.totalorder %s160, %s162
      %p169 = scmp.eq.s32.totalorder %s26, 1
      %p170 = por %p168, %p169
      %p171 = scmp.ne.s32.totalorder %s162, %s163
      %p172 = scmp.eq.s32.totalorder %s26, 0
      %p173 = por %p171, %p172
      %p174 = scmp.ne.s32.totalorder %s162, %s163
      %p175 = scmp.eq.s32.totalorder %s27, 1
      %p176 = por %p174, %p175
      %p178 = scmp.ne.s32.totalorder %s163, %s177
      %p179 = scmp.eq.s32.totalorder %s27, 0
      %p180 = por %p178, %p179
      %s182 = sadd.s32 %s181, 1
      %p185 = scmp.eq.s32.totalorder %s21, 1
      %p186 = scmp.ne.s32.totalorder %s181, %s183
      %p187 = scmp.eq.s32.totalorder %s21, 0
      %p188 = por %p186, %p187
      %p189 = scmp.ne.s32.totalorder %s181, %s183
      %p190 = scmp.eq.s32.totalorder %s26, 1
      %p191 = por %p189, %p190
      %p192 = scmp.ne.s32.totalorder %s183, %s184
      %p193 = scmp.eq.s32.totalorder %s26, 0
      %p194 = por %p192, %p193
      %p195 = scmp.ne.s32.totalorder %s183, %s184
      %p196 = scmp.eq.s32.totalorder %s27, 1
      %p197 = por %p195, %p196
      %p199 = scmp.ne.s32.totalorder %s184, %s198
      %p200 = scmp.eq.s32.totalorder %s27, 0
      %p201 = por %p199, %p200
      %s203 = sadd.s32 %s202, 1
      %p206 = scmp.eq.s32.totalorder %s21, 1
      %p207 = scmp.ne.s32.totalorder %s202, %s204
      %p208 = scmp.eq.s32.totalorder %s21, 0
      %p209 = por %p207, %p208
      %p210 = scmp.ne.s32.totalorder %s202, %s204
      %p211 = scmp.eq.s32.totalorder %s26, 1
      %p212 = por %p210, %p211
      %p213 = scmp.ne.s32.totalorder %s204, %s205
      %p214 = scmp.eq.s32.totalorder %s26, 0
      %p215 = por %p213, %p214
      %p216 = scmp.ne.s32.totalorder %s204, %s205
      %p217 = scmp.eq.s32.totalorder %s27, 1
      %p218 = por %p216, %p217
      %p220 = scmp.ne.s32.totalorder %s205, %s219
      %p221 = scmp.eq.s32.totalorder %s27, 0
      %p222 = por %p220, %p221
      %s224 = sadd.s32 %s223, 1
      %p227 = scmp.eq.s32.totalorder %s21, 1
      %p228 = scmp.ne.s32.totalorder %s223, %s225
      %p229 = scmp.eq.s32.totalorder %s21, 0
      %p230 = por %p228, %p229
      %p231 = scmp.ne.s32.totalorder %s223, %s225
      %p232 = scmp.eq.s32.totalorder %s26, 1
      %p233 = por %p231, %p232
      %p234 = scmp.ne.s32.totalorder %s225, %s226
      %p235 = scmp.eq.s32.totalorder %s26, 0
      %p236 = por %p234, %p235
      %p237 = scmp.ne.s32.totalorder %s225, %s226
      %p238 = scmp.eq.s32.totalorder %s27, 1
      %p239 = por %p237, %p238
      %p241 = scmp.ne.s32.totalorder %s226, %s240
      %p242 = scmp.eq.s32.totalorder %s27, 0
      %p243 = por %p241, %p242
      %s244 = ssub.s32 %s21, %s28
      %p245 = scmp.eq.s32.totalorder %s244, 0
      %s247 = sadd.s32 %s246, 1
      %s248 = scalar_select %p245, %s246, %s247
      %p251 = pneg %p245
      %p252 = scmp.eq.s32.totalorder %s21, 1
      %p253 = por %p251, %p252
      %p254 = scmp.ne.s32.totalorder %s246, %s249
      %p255 = scmp.eq.s32.totalorder %s21, 0
      %p256 = por %p254, %p255
      %p257 = scmp.ne.s32.totalorder %s246, %s249
      %p258 = scmp.eq.s32.totalorder %s26, 1
      %p259 = por %p257, %p258
      %p260 = scmp.ne.s32.totalorder %s249, %s250
      %p261 = scmp.eq.s32.totalorder %s26, 0
      %p262 = por %p260, %p261
      %p263 = scmp.ne.s32.totalorder %s249, %s250
      %p264 = scmp.eq.s32.totalorder %s27, 1
      %p265 = por %p263, %p264
      %p267 = scmp.ne.s32.totalorder %s250, %s266
      %p268 = scmp.eq.s32.totalorder %s27, 0
      %p269 = por %p267, %p268
      %p270 = scmp.le.s32.totalorder 1, %s21
      %p271 = scmp.lt.s32.totalorder %s21, 3
      %p272 = pnand %p270, %p271
      %p273 = pneg %p272
      // Predicated region
      $region9: #{tpu_custom_call.1} parent=5 // pred_check
        _
      $region10: #{tpu_custom_call.1} parent=5 // pred_check_branch
        %275 = sbr.rel (%p272) target = $region12
      $region11: #{tpu_custom_call.1} parent=5 // pred_region
        %s276 = ssub.s32 %s21, 1
        // Predicated region
        $region13: #{tpu_custom_call.1} parent=11 // pred_check
          %p277 = pneg %p68
        $region14: #{tpu_custom_call.1} parent=11 // pred_check_branch
          %279 = sbr.rel (%p277) target = $region16
        $region15: #{tpu_custom_call.1} parent=11 // pred_region
          _
        $region16: #{tpu_custom_call.1} parent=11 // pred_fallthru
          _
        // Predicated region
        $region17: #{tpu_custom_call.1} parent=11 // pred_check
          %p280 = pneg %p89
        $region18: #{tpu_custom_call.1} parent=11 // pred_check_branch
          %282 = sbr.rel (%p280) target = $region20
        $region19: #{tpu_custom_call.1} parent=11 // pred_region
          _
        $region20: #{tpu_custom_call.1} parent=11 // pred_fallthru
          _
        // Predicated region
        $region21: #{tpu_custom_call.1} parent=11 // pred_check
          %p283 = pneg %p110
        $region22: #{tpu_custom_call.1} parent=11 // pred_check_branch
          %285 = sbr.rel (%p283) target = $region24
        $region23: #{tpu_custom_call.1} parent=11 // pred_region
          _
        $region24: #{tpu_custom_call.1} parent=11 // pred_fallthru
          _
        // Predicated region
        $region25: #{tpu_custom_call.1} parent=11 // pred_check
          %p286 = pneg %p131
        $region26: #{tpu_custom_call.1} parent=11 // pred_check_branch
          %288 = sbr.rel (%p286) target = $region28
        $region27: #{tpu_custom_call.1} parent=11 // pred_region
          _
        $region28: #{tpu_custom_call.1} parent=11 // pred_fallthru
          _
        // Predicated region
        $region29: #{tpu_custom_call.1} parent=11 // pred_check
          %p289 = pneg %p152
        $region30: #{tpu_custom_call.1} parent=11 // pred_check_branch
          %291 = sbr.rel (%p289) target = $region32
        $region31: #{tpu_custom_call.1} parent=11 // pred_region
          %s293 = ssub.s32 512, 512
          %294 = vsyncadd [#allocation3], %s293
          %s295 = sshll.u32 [#allocation2], 4
          %s296 = int_to_ptr.vmem [resolvable:$true] %s295
          %301 = dma.hbm_to_vmem [thread:$0]  %s5, 512, %s296, [#allocation3], 128, 128, 8
        $region32: #{tpu_custom_call.1} parent=11 // pred_fallthru
          _
        // Predicated region
        $region33: #{tpu_custom_call.1} parent=11 // pred_check
          %p302 = pneg %p173
        $region34: #{tpu_custom_call.1} parent=11 // pred_check_branch
          %304 = sbr.rel (%p302) target = $region36
        $region35: #{tpu_custom_call.1} parent=11 // pred_region
          %s306 = ssub.s32 512, 512
          %307 = vsyncadd [#allocation6], %s306
          %s308 = sshll.u32 [#allocation5], 4
          %s309 = int_to_ptr.vmem [resolvable:$true] %s308
          %314 = dma.hbm_to_vmem [thread:$0]  %s6, 512, %s309, [#allocation6], 128, 128, 8
        $region36: #{tpu_custom_call.1} parent=11 // pred_fallthru
          _
        // Predicated region
        $region37: #{tpu_custom_call.1} parent=11 // pred_check
          %p315 = pneg %p194
        $region38: #{tpu_custom_call.1} parent=11 // pred_check_branch
          %317 = sbr.rel (%p315) target = $region40
        $region39: #{tpu_custom_call.1} parent=11 // pred_region
          _
        $region40: #{tpu_custom_call.1} parent=11 // pred_fallthru
          _
        // Predicated region
        $region41: #{tpu_custom_call.1} parent=11 // pred_check
          %p318 = pneg %p215
        $region42: #{tpu_custom_call.1} parent=11 // pred_check_branch
          %320 = sbr.rel (%p318) target = $region44
        $region43: #{tpu_custom_call.1} parent=11 // pred_region
          _
        $region44: #{tpu_custom_call.1} parent=11 // pred_fallthru
          _
        // Predicated region
        $region45: #{tpu_custom_call.1} parent=11 // pred_check
          %p321 = pneg %p236
        $region46: #{tpu_custom_call.1} parent=11 // pred_check_branch
          %323 = sbr.rel (%p321) target = $region48
        $region47: #{tpu_custom_call.1} parent=11 // pred_region
          _
        $region48: #{tpu_custom_call.1} parent=11 // pred_fallthru
          _
      $region12: #{tpu_custom_call.1} parent=5 // pred_fallthru
        _
      %p324 = scmp.lt.s32.totalorder %s21, 2
      // Predicated region
      $region49: #{tpu_custom_call.1} parent=5 // pred_check
        %p325 = pneg %p324
      $region50: #{tpu_custom_call.1} parent=5 // pred_check_branch
        %327 = sbr.rel (%p325) target = $region52
      $region51: #{tpu_custom_call.1} parent=5 // pred_region
        // Predicated region
        $region53: #{tpu_custom_call.1} parent=51 // pred_check
          %p328 = pneg %p41
        $region54: #{tpu_custom_call.1} parent=51 // pred_check_branch
          %330 = sbr.rel (%p328) target = $region56
        $region55: #{tpu_custom_call.1} parent=51 // pred_region
          %s331 = smul.u32 2, %s21
          %p332 = scmp.lt.s32.totalorder %s331, 3
          %s333 = scalar_select %p332, %s331, 3
          %s334 = smul.addr %s333, 8
          %s335 = scalar_lea.vmem %s0, %s334
          %s336 = smul.u32 2, %s21
        $region56: #{tpu_custom_call.1} parent=51 // pred_fallthru
          _
      $region52: #{tpu_custom_call.1} parent=5 // pred_fallthru
        _
      %p337 = scmp.le.s32.totalorder 1, %s21
      %p338 = scmp.lt.s32.totalorder %s21, 3
      %p339 = pnand %p337, %p338
      %p340 = pneg %p339
      // Predicated region
      $region57: #{tpu_custom_call.1} parent=5 // pred_check
        _
      $region58: #{tpu_custom_call.1} parent=5 // pred_check_branch
        %342 = sbr.rel (%p339) target = $region60
      $region59: #{tpu_custom_call.1} parent=5 // pred_region
        %s343 = ssub.s32 %s21, 1
        // Predicated region
        $region61: #{tpu_custom_call.1} parent=59 // pred_check
          %p344 = pneg %p152
        $region62: #{tpu_custom_call.1} parent=59 // pred_check_branch
          %346 = sbr.rel (%p344) target = $region64
        $region63: #{tpu_custom_call.1} parent=59 // pred_region
          %347 = dma.done [#allocation3], 512
        $region64: #{tpu_custom_call.1} parent=59 // pred_fallthru
          _
        // Predicated region
        $region65: #{tpu_custom_call.1} parent=59 // pred_check
          %p348 = pneg %p173
        $region66: #{tpu_custom_call.1} parent=59 // pred_check_branch
          %350 = sbr.rel (%p348) target = $region68
        $region67: #{tpu_custom_call.1} parent=59 // pred_region
          %351 = dma.done [#allocation6], 512
        $region68: #{tpu_custom_call.1} parent=59 // pred_fallthru
          _
        %s352 = smul.u32 2, %s26
        %p353 = scmp.lt.s32.totalorder %s352, 3
        %s354 = scalar_select %p353, %s352, 3
        %s355 = smul.addr %s354, 8
        %s356 = scalar_lea.vmem %s0, %s355
        %p357 = pneg %p47
        %p358 = pneg %p44
        %p359 = pneg %p68
        %p360 = pneg %p65
        %p361 = pneg %p89
        %p362 = pneg %p86
        %p363 = pneg %p110
        %p364 = pneg %p107
        %p365 = pneg %p131
        %p366 = pneg %p128
        %p367 = pneg %p152
        %p368 = pneg %p149
        %p369 = pneg %p173
        %p370 = pneg %p170
        %p371 = pneg %p194
        %p372 = pneg %p191
        %p373 = pneg %p215
        %p374 = pneg %p212
        %p375 = pneg %p236
        %p376 = pneg %p233
        %p377 = pneg %p262
        %p378 = pneg %p259
        %s379 = sand.u32 %s249, 1
        %s380 = scalar_lea.sflag [#allocation4], %s379
        %s381 = sand.u32 %s249, 1
        %s382 = smul.addr %s381, 4
        %s383 = scalar_lea.vmem [#allocation7], %s382
        %s384 = smul.u32 2, %s26
        %p385 = scmp.lt.s32.totalorder %s384, 3
        %s386 = scalar_select %p385, %s384, 3
        %s387 = smul.addr %s386, 8
        %s388 = scalar_lea.vmem %s0, %s387
        %s389 = smul.u32 2, %s26
        %s390 = smul.u32 2, %s26
        %v391 = vld [vmem:[%s1] sm:$0xff]
        %v392 = vld [vmem:[%s1 + $0x8] sm:$0xff]
        %v393 = vld [vmem:[%s1 + $0x10] sm:$0xff]
        %v394 = vld [vmem:[%s1 + $0x18] sm:$0xff]
        %v395 = vld [vmem:[%s388] sm:$0x1f]
        %v396 = vld [vmem:[%s388 + $0x8] sm:$0x1f]
        %vm397 = vcmask 39936
        %v399 = vsel %vm397, %v391, 0
        %v402 = vsel %vm397, %v392, 0
        %v405 = vsel %vm397, %v393, 0
        %v408 = vsel %vm397, %v394, 0
        %vm410 = vcmask 1044480
        %v412 = vsel %vm410, %v395, 0
        %v415 = vsel %vm410, %v396, 0
        %417 = vmatprep.subr.mxu0 0.0
        %418 = vmatpush1.msra.mxu0 0.0
        %419 = vmatprep.subr.mxu0 0.0
        %420 = vmatpush1.msra.mxu0 0.0
        %421 = vmatprep.subr.mxu0 0.0
        %422 = vmatpush1.msra.mxu0 0.0
        %423 = vmatprep.subr.mxu0 0.0
        %424 = vmatpush1.msra.mxu0 0.0
        %425 = vmatprep.subr.mxu0 0.0
        %426 = vmatpush1.msra.mxu0 0.0
        %427 = vmatprep.subr.mxu0 0.0
        %428 = vmatpush1.msra.mxu0 0.0
        %429 = vmatprep.subr.mxu0 0.0
        %430 = vmatpush1.msra.mxu0 0.0
        %431 = vmatprep.subr.mxu0 0.0
        %432 = vmatpush1.msra.mxu0 0.0
        %433 = vmatprep.subr.mxu0 0.0
        %434 = vmatpush1.msra.mxu0 0.0
        %435 = vmatprep.subr.mxu0 0.0
        %436 = vmatpush1.msra.mxu0 0.0
        %437 = vmatprep.subr.mxu0 0.0
        %438 = vmatpush1.msra.mxu0 0.0
        %439 = vmatprep.subr.mxu0 0.0
        %440 = vmatpush1.msra.mxu0 0.0
        %441 = vmatprep.subr.mxu0 0.0
        %442 = vmatpush1.msra.mxu0 0.0
        %443 = vmatprep.subr.mxu0 0.0
        %444 = vmatpush1.msra.mxu0 0.0
        %445 = vmatprep.subr.mxu0 0.0
        %446 = vmatpush1.msra.mxu0 0.0
        %447 = vmatprep.subr.mxu0 %v415
        %448 = vmatpush1.msra.mxu0 %v412
        %449 = vmatprep.subr.mxu0 0.0
        %450 = vmatpush2.msra.mxu0 0.0
        %451 = vmatprep.subr.mxu0 0.0
        %452 = vmatpush2.msra.mxu0 0.0
        %453 = vmatprep.subr.mxu0 0.0
        %454 = vmatpush2.msra.mxu0 0.0
        %455 = vmatprep.subr.mxu0 0.0
        %456 = vmatpush2.msra.mxu0 0.0
        %457 = vmatprep.subr.mxu0 0.0
        %458 = vmatpush2.msra.mxu0 0.0
        %459 = vmatprep.subr.mxu0 0.0
        %460 = vmatpush2.msra.mxu0 0.0
        %461 = vmatprep.subr.mxu0 0.0
        %462 = vmatpush2.msra.mxu0 0.0
        %463 = vmatprep.subr.mxu0 0.0
        %464 = vmatpush2.msra.mxu0 0.0
        %465 = vmatprep.subr.mxu0 0.0
        %466 = vmatpush2.msra.mxu0 0.0
        %467 = vmatprep.subr.mxu0 0.0
        %468 = vmatpush2.msra.mxu0 0.0
        %469 = vmatprep.subr.mxu0 0.0
        %470 = vmatpush2.msra.mxu0 0.0
        %471 = vmatprep.subr.mxu0 0.0
        %472 = vmatpush2.msra.mxu0 0.0
        %473 = vmatprep.subr.mxu0 0.0
        %474 = vmatpush2.msra.mxu0 0.0
        %475 = vmatprep.subr.mxu0 0.0
        %476 = vmatpush2.msra.mxu0 0.0
        %477 = vmatprep.subr.mxu0 0.0
        %478 = vmatpush2.msra.mxu0 0.0
        %479 = vmatprep.subr.mxu0 0.0
        %480 = vmatpush2.msra.mxu0 0.0
        %481 = vmatprep.mubr.f32.mxu0 0.0
        %482 = vmatmul.mubr.f32.gmra.mxu0 %v399
        %v483 = vpop.f32.mrf.mxu0
        %v484 = vadd.f32 0.0, %v483
        %v485 = vpop.f32.mrf.mxu0
        %v486 = vadd.f32 0.0, %v485
        %487 = vmatprep.mubr.f32.mxu0 0.0
        %488 = vmatmul.mubr.f32.gmra.mxu0 %v402
        %v489 = vpop.f32.mrf.mxu0
        %v490 = vadd.f32 0.0, %v489
        %v491 = vpop.f32.mrf.mxu0
        %v492 = vadd.f32 0.0, %v491
        %493 = vmatprep.mubr.f32.mxu0 0.0
        %494 = vmatmul.mubr.f32.gmra.mxu0 %v405
        %v495 = vpop.f32.mrf.mxu0
        %v496 = vadd.f32 0.0, %v495
        %v497 = vpop.f32.mrf.mxu0
        %v498 = vadd.f32 0.0, %v497
        %499 = vmatprep.mubr.f32.mxu0 0.0
        %500 = vmatmul.mubr.f32.gmra.mxu0 %v408
        %v501 = vpop.f32.mrf.mxu0
        %v502 = vadd.f32 0.0, %v501
        %v503 = vpop.f32.mrf.mxu0
        %v504 = vadd.f32 0.0, %v503
        %505 = vdwg.mxu0
        %v506 = vtanh.pop %v484
        %v507 = vtanh.pop %v486
        %v508 = vtanh.pop %v490
        %v509 = vtanh.pop %v492
        %v510 = vtanh.pop %v496
        %v511 = vtanh.pop %v498
        %v512 = vtanh.pop %v502
        %v513 = vtanh.pop %v504
        %v514 = vld [vmem:[%s2] sm:$0xff]
        %v515 = vld [vmem:[%s2 + $0x8] sm:$0xff]
        %v516 = vld [vmem:[%s2 + $0x10] sm:$0xff]
        %v517 = vld [vmem:[%s2 + $0x18] sm:$0xff]
        %v518 = vld [vmem:[%s3] sm:$0xff]
        %v519 = vld [vmem:[%s3 + $0x8] sm:$0xff]
        %v520 = vld [vmem:[%s3 + $0x10] sm:$0xff]
        %v521 = vld [vmem:[%s3 + $0x18] sm:$0xff]
        %v522 = vld [vmem:[%s4] sm:$0xff]
        %v523 = vld [vmem:[%s4 + $0x8] sm:$0xff]
        %v524 = vld [vmem:[%s4 + $0x10] sm:$0xff]
        %v525 = vld [vmem:[%s4 + $0x18] sm:$0xff]
        %527 = vset.pattern.permute.xlu0 0
        %528 = vperm.xlu0 %527, %v522
        %v529 = vpop.permute.xlu0 %528
        %532 = vset.pattern.permute.xlu0 0
        %533 = vperm.xlu0 %532, %v523
        %v534 = vpop.permute.xlu0 %533
        %537 = vset.pattern.permute.xlu0 0
        %538 = vperm.xlu0 %537, %v524
        %v539 = vpop.permute.xlu0 %538
        %542 = vset.pattern.permute.xlu0 0
        %543 = vperm.xlu0 %542, %v525
        %v544 = vpop.permute.xlu0 %543
        %vm546 = vcmask 261120
        %v548 = vsel %vm546, %v518, 0
        %v551 = vsel %vm546, %v519, 0
        %v554 = vsel %vm546, %v520, 0
        %v557 = vsel %vm546, %v521, 0
        %559 = vmatprep.subr.mxu0 0.0
        %560 = vmatpush1.msra.mxu0 0.0
        %561 = vmatprep.subr.mxu0 0.0
        %562 = vmatpush1.msra.mxu0 0.0
        %563 = vmatprep.subr.mxu0 0.0
        %564 = vmatpush1.msra.mxu0 0.0
        %565 = vmatprep.subr.mxu0 0.0
        %566 = vmatpush1.msra.mxu0 0.0
        %567 = vmatprep.subr.mxu0 0.0
        %568 = vmatpush1.msra.mxu0 0.0
        %569 = vmatprep.subr.mxu0 0.0
        %570 = vmatpush1.msra.mxu0 0.0
        %571 = vmatprep.subr.mxu0 0.0
        %572 = vmatpush1.msra.mxu0 0.0
        %573 = vmatprep.subr.mxu0 0.0
        %574 = vmatpush1.msra.mxu0 0.0
        %575 = vmatprep.subr.mxu0 0.0
        %576 = vmatpush1.msra.mxu0 0.0
        %577 = vmatprep.subr.mxu0 0.0
        %578 = vmatpush1.msra.mxu0 0.0
        %579 = vmatprep.subr.mxu0 0.0
        %580 = vmatpush1.msra.mxu0 0.0
        %581 = vmatprep.subr.mxu0 0.0
        %582 = vmatpush1.msra.mxu0 0.0
        %583 = vmatprep.subr.mxu0 %v513
        %584 = vmatpush1.msra.mxu0 %v512
        %585 = vmatprep.subr.mxu0 %v511
        %586 = vmatpush1.msra.mxu0 %v510
        %587 = vmatprep.subr.mxu0 %v509
        %588 = vmatpush1.msra.mxu0 %v508
        %589 = vmatprep.subr.mxu0 %v507
        %590 = vmatpush1.msra.mxu0 %v506
        %591 = vmatprep.subr.mxu0 0.0
        %592 = vmatpush2.msra.mxu0 0.0
        %593 = vmatprep.subr.mxu0 0.0
        %594 = vmatpush2.msra.mxu0 0.0
        %595 = vmatprep.subr.mxu0 0.0
        %596 = vmatpush2.msra.mxu0 0.0
        %597 = vmatprep.subr.mxu0 0.0
        %598 = vmatpush2.msra.mxu0 0.0
        %599 = vmatprep.subr.mxu0 0.0
        %600 = vmatpush2.msra.mxu0 0.0
        %601 = vmatprep.subr.mxu0 0.0
        %602 = vmatpush2.msra.mxu0 0.0
        %603 = vmatprep.subr.mxu0 0.0
        %604 = vmatpush2.msra.mxu0 0.0
        %605 = vmatprep.subr.mxu0 0.0
        %606 = vmatpush2.msra.mxu0 0.0
        %607 = vmatprep.subr.mxu0 0.0
        %608 = vmatpush2.msra.mxu0 0.0
        %609 = vmatprep.subr.mxu0 0.0
        %610 = vmatpush2.msra.mxu0 0.0
        %611 = vmatprep.subr.mxu0 0.0
        %612 = vmatpush2.msra.mxu0 0.0
        %613 = vmatprep.subr.mxu0 0.0
        %614 = vmatpush2.msra.mxu0 0.0
        %615 = vmatprep.subr.mxu0 0.0
        %616 = vmatpush2.msra.mxu0 0.0
        %617 = vmatprep.subr.mxu0 0.0
        %618 = vmatpush2.msra.mxu0 0.0
        %619 = vmatprep.subr.mxu0 0.0
        %620 = vmatpush2.msra.mxu0 0.0
        %621 = vmatprep.subr.mxu0 0.0
        %622 = vmatpush2.msra.mxu0 0.0
        %623 = vmatprep.mubr.f32.mxu0 0.0
        %624 = vmatmul.mubr.f32.gmra.mxu0 %v548
        %v625 = vpop.f32.mrf.mxu0
        %v626 = vadd.f32 %v529, %v625
        %v627 = vpop.f32.mrf.mxu0
        %v628 = vadd.f32 %v529, %v627
        %629 = vmatprep.mubr.f32.mxu0 0.0
        %630 = vmatmul.mubr.f32.gmra.mxu0 %v551
        %v631 = vpop.f32.mrf.mxu0
        %v632 = vadd.f32 %v534, %v631
        %v633 = vpop.f32.mrf.mxu0
        %v634 = vadd.f32 %v534, %v633
        %635 = vmatprep.mubr.f32.mxu0 0.0
        %636 = vmatmul.mubr.f32.gmra.mxu0 %v554
        %v637 = vpop.f32.mrf.mxu0
        %v638 = vadd.f32 %v539, %v637
        %v639 = vpop.f32.mrf.mxu0
        %v640 = vadd.f32 %v539, %v639
        %641 = vmatprep.mubr.f32.mxu0 0.0
        %642 = vmatmul.mubr.f32.gmra.mxu0 %v557
        %v643 = vpop.f32.mrf.mxu0
        %v644 = vadd.f32 %v544, %v643
        %v645 = vpop.f32.mrf.mxu0
        %v646 = vadd.f32 %v544, %v645
        %647 = vdwg.mxu0
        %v648 = vtanh.pop %v626
        %v649 = vtanh.pop %v628
        %v650 = vtanh.pop %v632
        %v651 = vtanh.pop %v634
        %v652 = vtanh.pop %v638
        %v653 = vtanh.pop %v640
        %v654 = vtanh.pop %v644
        %v655 = vtanh.pop %v646
        %v656 = vsub.f32 0.0, %v648
        %v657 = vsub.f32 0.0, %v649
        %v658 = vsub.f32 0.0, %v650
        %v659 = vsub.f32 0.0, %v651
        %v660 = vsub.f32 0.0, %v652
        %v661 = vsub.f32 0.0, %v653
        %v662 = vsub.f32 0.0, %v654
        %v663 = vsub.f32 0.0, %v655
        %v665 = vsel %vm546, %v514, 0
        %v668 = vsel %vm546, %v515, 0
        %v671 = vsel %vm546, %v516, 0
        %v674 = vsel %vm546, %v517, 0
        %676 = vmatprep.subr.mxu0 0.0
        %677 = vmatpush1.msra.mxu0 0.0
        %678 = vmatprep.subr.mxu0 0.0
        %679 = vmatpush1.msra.mxu0 0.0
        %680 = vmatprep.subr.mxu0 0.0
        %681 = vmatpush1.msra.mxu0 0.0
        %682 = vmatprep.subr.mxu0 0.0
        %683 = vmatpush1.msra.mxu0 0.0
        %684 = vmatprep.subr.mxu0 0.0
        %685 = vmatpush1.msra.mxu0 0.0
        %686 = vmatprep.subr.mxu0 0.0
        %687 = vmatpush1.msra.mxu0 0.0
        %688 = vmatprep.subr.mxu0 0.0
        %689 = vmatpush1.msra.mxu0 0.0
        %690 = vmatprep.subr.mxu0 0.0
        %691 = vmatpush1.msra.mxu0 0.0
        %692 = vmatprep.subr.mxu0 0.0
        %693 = vmatpush1.msra.mxu0 0.0
        %694 = vmatprep.subr.mxu0 0.0
        %695 = vmatpush1.msra.mxu0 0.0
        %696 = vmatprep.subr.mxu0 0.0
        %697 = vmatpush1.msra.mxu0 0.0
        %698 = vmatprep.subr.mxu0 0.0
        %699 = vmatpush1.msra.mxu0 0.0
        %700 = vmatprep.subr.mxu0 %v663
        %701 = vmatpush1.msra.mxu0 %v662
        %702 = vmatprep.subr.mxu0 %v661
        %703 = vmatpush1.msra.mxu0 %v660
        %704 = vmatprep.subr.mxu0 %v659
        %705 = vmatpush1.msra.mxu0 %v658
        %706 = vmatprep.subr.mxu0 %v657
        %707 = vmatpush1.msra.mxu0 %v656
        %708 = vmatprep.subr.mxu0 0.0
        %709 = vmatpush2.msra.mxu0 0.0
        %710 = vmatprep.subr.mxu0 0.0
        %711 = vmatpush2.msra.mxu0 0.0
        %712 = vmatprep.subr.mxu0 0.0
        %713 = vmatpush2.msra.mxu0 0.0
        %714 = vmatprep.subr.mxu0 0.0
        %715 = vmatpush2.msra.mxu0 0.0
        %716 = vmatprep.subr.mxu0 0.0
        %717 = vmatpush2.msra.mxu0 0.0
        %718 = vmatprep.subr.mxu0 0.0
        %719 = vmatpush2.msra.mxu0 0.0
        %720 = vmatprep.subr.mxu0 0.0
        %721 = vmatpush2.msra.mxu0 0.0
        %722 = vmatprep.subr.mxu0 0.0
        %723 = vmatpush2.msra.mxu0 0.0
        %724 = vmatprep.subr.mxu0 0.0
        %725 = vmatpush2.msra.mxu0 0.0
        %726 = vmatprep.subr.mxu0 0.0
        %727 = vmatpush2.msra.mxu0 0.0
        %728 = vmatprep.subr.mxu0 0.0
        %729 = vmatpush2.msra.mxu0 0.0
        %730 = vmatprep.subr.mxu0 0.0
        %731 = vmatpush2.msra.mxu0 0.0
        %732 = vmatprep.subr.mxu0 0.0
        %733 = vmatpush2.msra.mxu0 0.0
        %734 = vmatprep.subr.mxu0 0.0
        %735 = vmatpush2.msra.mxu0 0.0
        %736 = vmatprep.subr.mxu0 0.0
        %737 = vmatpush2.msra.mxu0 0.0
        %738 = vmatprep.subr.mxu0 0.0
        %739 = vmatpush2.msra.mxu0 0.0
        %740 = vmatprep.mubr.f32.mxu0 0.0
        %741 = vmatmul.mubr.f32.gmra.mxu0 %v665
        %v742 = vpop.f32.mrf.mxu0
        %v743 = vadd.f32 %v529, %v742
        %v744 = vpop.f32.mrf.mxu0
        %v745 = vadd.f32 %v529, %v744
        %746 = vmatprep.mubr.f32.mxu0 0.0
        %747 = vmatmul.mubr.f32.gmra.mxu0 %v668
        %v748 = vpop.f32.mrf.mxu0
        %v749 = vadd.f32 %v534, %v748
        %v750 = vpop.f32.mrf.mxu0
        %v751 = vadd.f32 %v534, %v750
        %752 = vmatprep.mubr.f32.mxu0 0.0
        %753 = vmatmul.mubr.f32.gmra.mxu0 %v671
        %v754 = vpop.f32.mrf.mxu0
        %v755 = vadd.f32 %v539, %v754
        %v756 = vpop.f32.mrf.mxu0
        %v757 = vadd.f32 %v539, %v756
        %758 = vmatprep.mubr.f32.mxu0 0.0
        %759 = vmatmul.mubr.f32.gmra.mxu0 %v674
        %v760 = vpop.f32.mrf.mxu0
        %v761 = vadd.f32 %v544, %v760
        %v762 = vpop.f32.mrf.mxu0
        %v763 = vadd.f32 %v544, %v762
        %764 = vdwg.mxu0
        %v765 = vtanh.pop %v743
        %v766 = vtanh.pop %v745
        %v767 = vtanh.pop %v749
        %v768 = vtanh.pop %v751
        %v769 = vtanh.pop %v755
        %v770 = vtanh.pop %v757
        %v771 = vtanh.pop %v761
        %v772 = vtanh.pop %v763
        %v773 = vadd.f32 %v506, %v765
        %v774 = vadd.f32 %v507, %v766
        %v775 = vadd.f32 %v508, %v767
        %v776 = vadd.f32 %v509, %v768
        %v777 = vadd.f32 %v510, %v769
        %v778 = vadd.f32 %v511, %v770
        %v779 = vadd.f32 %v512, %v771
        %v780 = vadd.f32 %v513, %v772
        %v781 = vld [vmem:[#allocation2] sm:$0xff]
        %v782 = vld [vmem:[#allocation2 + $0x8] sm:$0xff]
        %v783 = vld [vmem:[#allocation2 + $0x10] sm:$0xff]
        %v784 = vld [vmem:[#allocation2 + $0x18] sm:$0xff]
        %v785 = vld [vmem:[#allocation5] sm:$0xff]
        %v786 = vld [vmem:[#allocation5 + $0x8] sm:$0xff]
        %v787 = vld [vmem:[#allocation5 + $0x10] sm:$0xff]
        %v788 = vld [vmem:[#allocation5 + $0x18] sm:$0xff]
        %v789 = vld [vmem:[%s7] sm:$0xff]
        %v790 = vld [vmem:[%s7 + $0x8] sm:$0xff]
        %v791 = vld [vmem:[%s7 + $0x10] sm:$0xff]
        %v792 = vld [vmem:[%s7 + $0x18] sm:$0xff]
        %794 = vset.pattern.permute.xlu0 0
        %795 = vperm.xlu0 %794, %v789
        %v796 = vpop.permute.xlu0 %795
        %799 = vset.pattern.permute.xlu0 0
        %800 = vperm.xlu0 %799, %v790
        %v801 = vpop.permute.xlu0 %800
        %804 = vset.pattern.permute.xlu0 0
        %805 = vperm.xlu0 %804, %v791
        %v806 = vpop.permute.xlu0 %805
        %809 = vset.pattern.permute.xlu0 0
        %810 = vperm.xlu0 %809, %v792
        %v811 = vpop.permute.xlu0 %810
        %v814 = vsel %vm546, %v785, 0
        %v817 = vsel %vm546, %v786, 0
        %v820 = vsel %vm546, %v787, 0
        %v823 = vsel %vm546, %v788, 0
        %825 = vmatprep.subr.mxu0 0.0
        %826 = vmatpush1.msra.mxu0 0.0
        %827 = vmatprep.subr.mxu0 0.0
        %828 = vmatpush1.msra.mxu0 0.0
        %829 = vmatprep.subr.mxu0 0.0
        %830 = vmatpush1.msra.mxu0 0.0
        %831 = vmatprep.subr.mxu0 0.0
        %832 = vmatpush1.msra.mxu0 0.0
        %833 = vmatprep.subr.mxu0 0.0
        %834 = vmatpush1.msra.mxu0 0.0
        %835 = vmatprep.subr.mxu0 0.0
        %836 = vmatpush1.msra.mxu0 0.0
        %837 = vmatprep.subr.mxu0 0.0
        %838 = vmatpush1.msra.mxu0 0.0
        %839 = vmatprep.subr.mxu0 0.0
        %840 = vmatpush1.msra.mxu0 0.0
        %841 = vmatprep.subr.mxu0 0.0
        %842 = vmatpush1.msra.mxu0 0.0
        %843 = vmatprep.subr.mxu0 0.0
        %844 = vmatpush1.msra.mxu0 0.0
        %845 = vmatprep.subr.mxu0 0.0
        %846 = vmatpush1.msra.mxu0 0.0
        %847 = vmatprep.subr.mxu0 0.0
        %848 = vmatpush1.msra.mxu0 0.0
        %849 = vmatprep.subr.mxu0 %v780
        %850 = vmatpush1.msra.mxu0 %v779
        %851 = vmatprep.subr.mxu0 %v778
        %852 = vmatpush1.msra.mxu0 %v777
        %853 = vmatprep.subr.mxu0 %v776
        %854 = vmatpush1.msra.mxu0 %v775
        %855 = vmatprep.subr.mxu0 %v774
        %856 = vmatpush1.msra.mxu0 %v773
        %857 = vmatprep.subr.mxu0 0.0
        %858 = vmatpush2.msra.mxu0 0.0
        %859 = vmatprep.subr.mxu0 0.0
        %860 = vmatpush2.msra.mxu0 0.0
        %861 = vmatprep.subr.mxu0 0.0
        %862 = vmatpush2.msra.mxu0 0.0
        %863 = vmatprep.subr.mxu0 0.0
        %864 = vmatpush2.msra.mxu0 0.0
        %865 = vmatprep.subr.mxu0 0.0
        %866 = vmatpush2.msra.mxu0 0.0
        %867 = vmatprep.subr.mxu0 0.0
        %868 = vmatpush2.msra.mxu0 0.0
        %869 = vmatprep.subr.mxu0 0.0
        %870 = vmatpush2.msra.mxu0 0.0
        %871 = vmatprep.subr.mxu0 0.0
        %872 = vmatpush2.msra.mxu0 0.0
        %873 = vmatprep.subr.mxu0 0.0
        %874 = vmatpush2.msra.mxu0 0.0
        %875 = vmatprep.subr.mxu0 0.0
        %876 = vmatpush2.msra.mxu0 0.0
        %877 = vmatprep.subr.mxu0 0.0
        %878 = vmatpush2.msra.mxu0 0.0
        %879 = vmatprep.subr.mxu0 0.0
        %880 = vmatpush2.msra.mxu0 0.0
        %881 = vmatprep.subr.mxu0 0.0
        %882 = vmatpush2.msra.mxu0 0.0
        %883 = vmatprep.subr.mxu0 0.0
        %884 = vmatpush2.msra.mxu0 0.0
        %885 = vmatprep.subr.mxu0 0.0
        %886 = vmatpush2.msra.mxu0 0.0
        %887 = vmatprep.subr.mxu0 0.0
        %888 = vmatpush2.msra.mxu0 0.0
        %889 = vmatprep.mubr.f32.mxu0 0.0
        %890 = vmatmul.mubr.f32.gmra.mxu0 %v814
        %v891 = vpop.f32.mrf.mxu0
        %v892 = vadd.f32 %v796, %v891
        %v893 = vpop.f32.mrf.mxu0
        %v894 = vadd.f32 %v796, %v893
        %895 = vmatprep.mubr.f32.mxu0 0.0
        %896 = vmatmul.mubr.f32.gmra.mxu0 %v817
        %v897 = vpop.f32.mrf.mxu0
        %v898 = vadd.f32 %v801, %v897
        %v899 = vpop.f32.mrf.mxu0
        %v900 = vadd.f32 %v801, %v899
        %901 = vmatprep.mubr.f32.mxu0 0.0
        %902 = vmatmul.mubr.f32.gmra.mxu0 %v820
        %v903 = vpop.f32.mrf.mxu0
        %v904 = vadd.f32 %v806, %v903
        %v905 = vpop.f32.mrf.mxu0
        %v906 = vadd.f32 %v806, %v905
        %907 = vmatprep.mubr.f32.mxu0 0.0
        %908 = vmatmul.mubr.f32.gmra.mxu0 %v823
        %v909 = vpop.f32.mrf.mxu0
        %v910 = vadd.f32 %v811, %v909
        %v911 = vpop.f32.mrf.mxu0
        %v912 = vadd.f32 %v811, %v911
        %913 = vdwg.mxu0
        %v914 = vtanh.pop %v892
        %v915 = vtanh.pop %v894
        %v916 = vtanh.pop %v898
        %v917 = vtanh.pop %v900
        %v918 = vtanh.pop %v904
        %v919 = vtanh.pop %v906
        %v920 = vtanh.pop %v910
        %v921 = vtanh.pop %v912
        %v922 = vsub.f32 %v656, %v914
        %v923 = vsub.f32 %v657, %v915
        %v924 = vsub.f32 %v658, %v916
        %v925 = vsub.f32 %v659, %v917
        %v926 = vsub.f32 %v660, %v918
        %v927 = vsub.f32 %v661, %v919
        %v928 = vsub.f32 %v662, %v920
        %v929 = vsub.f32 %v663, %v921
        %v931 = vsel %vm546, %v781, 0
        %v934 = vsel %vm546, %v782, 0
        %v937 = vsel %vm546, %v783, 0
        %v940 = vsel %vm546, %v784, 0
        %942 = vmatprep.subr.mxu0 0.0
        %943 = vmatpush1.msra.mxu0 0.0
        %944 = vmatprep.subr.mxu0 0.0
        %945 = vmatpush1.msra.mxu0 0.0
        %946 = vmatprep.subr.mxu0 0.0
        %947 = vmatpush1.msra.mxu0 0.0
        %948 = vmatprep.subr.mxu0 0.0
        %949 = vmatpush1.msra.mxu0 0.0
        %950 = vmatprep.subr.mxu0 0.0
        %951 = vmatpush1.msra.mxu0 0.0
        %952 = vmatprep.subr.mxu0 0.0
        %953 = vmatpush1.msra.mxu0 0.0
        %954 = vmatprep.subr.mxu0 0.0
        %955 = vmatpush1.msra.mxu0 0.0
        %956 = vmatprep.subr.mxu0 0.0
        %957 = vmatpush1.msra.mxu0 0.0
        %958 = vmatprep.subr.mxu0 0.0
        %959 = vmatpush1.msra.mxu0 0.0
        %960 = vmatprep.subr.mxu0 0.0
        %961 = vmatpush1.msra.mxu0 0.0
        %962 = vmatprep.subr.mxu0 0.0
        %963 = vmatpush1.msra.mxu0 0.0
        %964 = vmatprep.subr.mxu0 0.0
        %965 = vmatpush1.msra.mxu0 0.0
        %966 = vmatprep.subr.mxu0 %v929
        %967 = vmatpush1.msra.mxu0 %v928
        %968 = vmatprep.subr.mxu0 %v927
        %969 = vmatpush1.msra.mxu0 %v926
        %970 = vmatprep.subr.mxu0 %v925
        %971 = vmatpush1.msra.mxu0 %v924
        %972 = vmatprep.subr.mxu0 %v923
        %973 = vmatpush1.msra.mxu0 %v922
        %974 = vmatprep.subr.mxu0 0.0
        %975 = vmatpush2.msra.mxu0 0.0
        %976 = vmatprep.subr.mxu0 0.0
        %977 = vmatpush2.msra.mxu0 0.0
        %978 = vmatprep.subr.mxu0 0.0
        %979 = vmatpush2.msra.mxu0 0.0
        %980 = vmatprep.subr.mxu0 0.0
        %981 = vmatpush2.msra.mxu0 0.0
        %982 = vmatprep.subr.mxu0 0.0
        %983 = vmatpush2.msra.mxu0 0.0
        %984 = vmatprep.subr.mxu0 0.0
        %985 = vmatpush2.msra.mxu0 0.0
        %986 = vmatprep.subr.mxu0 0.0
        %987 = vmatpush2.msra.mxu0 0.0
        %988 = vmatprep.subr.mxu0 0.0
        %989 = vmatpush2.msra.mxu0 0.0
        %990 = vmatprep.subr.mxu0 0.0
        %991 = vmatpush2.msra.mxu0 0.0
        %992 = vmatprep.subr.mxu0 0.0
        %993 = vmatpush2.msra.mxu0 0.0
        %994 = vmatprep.subr.mxu0 0.0
        %995 = vmatpush2.msra.mxu0 0.0
        %996 = vmatprep.subr.mxu0 0.0
        %997 = vmatpush2.msra.mxu0 0.0
        %998 = vmatprep.subr.mxu0 0.0
        %999 = vmatpush2.msra.mxu0 0.0
        %1000 = vmatprep.subr.mxu0 0.0
        %1001 = vmatpush2.msra.mxu0 0.0
        %1002 = vmatprep.subr.mxu0 0.0
        %1003 = vmatpush2.msra.mxu0 0.0
        %1004 = vmatprep.subr.mxu0 0.0
        %1005 = vmatpush2.msra.mxu0 0.0
        %1006 = vmatprep.mubr.f32.mxu0 0.0
        %1007 = vmatmul.mubr.f32.gmra.mxu0 %v931
        %v1008 = vpop.f32.mrf.mxu0
        %v1009 = vadd.f32 %v796, %v1008
        %v1010 = vpop.f32.mrf.mxu0
        %v1011 = vadd.f32 %v796, %v1010
        %1012 = vmatprep.mubr.f32.mxu0 0.0
        %1013 = vmatmul.mubr.f32.gmra.mxu0 %v934
        %v1014 = vpop.f32.mrf.mxu0
        %v1015 = vadd.f32 %v801, %v1014
        %v1016 = vpop.f32.mrf.mxu0
        %v1017 = vadd.f32 %v801, %v1016
        %1018 = vmatprep.mubr.f32.mxu0 0.0
        %1019 = vmatmul.mubr.f32.gmra.mxu0 %v937
        %v1020 = vpop.f32.mrf.mxu0
        %v1021 = vadd.f32 %v806, %v1020
        %v1022 = vpop.f32.mrf.mxu0
        %v1023 = vadd.f32 %v806, %v1022
        %1024 = vmatprep.mubr.f32.mxu0 0.0
        %1025 = vmatmul.mubr.f32.gmra.mxu0 %v940
        %v1026 = vpop.f32.mrf.mxu0
        %v1027 = vadd.f32 %v811, %v1026
        %v1028 = vpop.f32.mrf.mxu0
        %v1029 = vadd.f32 %v811, %v1028
        %1030 = vdwg.mxu0
        %v1031 = vtanh.pop %v1009
        %v1032 = vtanh.pop %v1011
        %v1033 = vtanh.pop %v1015
        %v1034 = vtanh.pop %v1017
        %v1035 = vtanh.pop %v1021
        %v1036 = vtanh.pop %v1023
        %v1037 = vtanh.pop %v1027
        %v1038 = vtanh.pop %v1029
        %v1039 = vadd.f32 %v773, %v1031
        %v1040 = vadd.f32 %v774, %v1032
        %v1041 = vadd.f32 %v775, %v1033
        %v1042 = vadd.f32 %v776, %v1034
        %v1043 = vadd.f32 %v777, %v1035
        %v1044 = vadd.f32 %v778, %v1036
        %v1045 = vadd.f32 %v779, %v1037
        %v1046 = vadd.f32 %v780, %v1038
        %v1047 = vld [vmem:[%s8] sm:$0x3]
        %v1048 = vld [vmem:[%s9] sm:$0x3]
        %1050 = vset.pattern.permute.xlu0 0
        %1051 = vperm.xlu0 %1050, %v1048
        %v1052 = vpop.permute.xlu0 %1051
        %v1055 = vsel %vm546, %v1047, 0
        %1057 = vmatprep.subr.mxu0 0.0
        %1058 = vmatpush1.msra.mxu0 0.0
        %1059 = vmatprep.subr.mxu0 0.0
        %1060 = vmatpush1.msra.mxu0 0.0
        %1061 = vmatprep.subr.mxu0 0.0
        %1062 = vmatpush1.msra.mxu0 0.0
        %1063 = vmatprep.subr.mxu0 0.0
        %1064 = vmatpush1.msra.mxu0 0.0
        %1065 = vmatprep.subr.mxu0 0.0
        %1066 = vmatpush1.msra.mxu0 0.0
        %1067 = vmatprep.subr.mxu0 0.0
        %1068 = vmatpush1.msra.mxu0 0.0
        %1069 = vmatprep.subr.mxu0 0.0
        %1070 = vmatpush1.msra.mxu0 0.0
        %1071 = vmatprep.subr.mxu0 0.0
        %1072 = vmatpush1.msra.mxu0 0.0
        %1073 = vmatprep.subr.mxu0 0.0
        %1074 = vmatpush1.msra.mxu0 0.0
        %1075 = vmatprep.subr.mxu0 0.0
        %1076 = vmatpush1.msra.mxu0 0.0
        %1077 = vmatprep.subr.mxu0 0.0
        %1078 = vmatpush1.msra.mxu0 0.0
        %1079 = vmatprep.subr.mxu0 0.0
        %1080 = vmatpush1.msra.mxu0 0.0
        %1081 = vmatprep.subr.mxu0 %v1046
        %1082 = vmatpush1.msra.mxu0 %v1045
        %1083 = vmatprep.subr.mxu0 %v1044
        %1084 = vmatpush1.msra.mxu0 %v1043
        %1085 = vmatprep.subr.mxu0 %v1042
        %1086 = vmatpush1.msra.mxu0 %v1041
        %1087 = vmatprep.subr.mxu0 %v1040
        %1088 = vmatpush1.msra.mxu0 %v1039
        %1089 = vmatprep.subr.mxu0 0.0
        %1090 = vmatpush2.msra.mxu0 0.0
        %1091 = vmatprep.subr.mxu0 0.0
        %1092 = vmatpush2.msra.mxu0 0.0
        %1093 = vmatprep.subr.mxu0 0.0
        %1094 = vmatpush2.msra.mxu0 0.0
        %1095 = vmatprep.subr.mxu0 0.0
        %1096 = vmatpush2.msra.mxu0 0.0
        %1097 = vmatprep.subr.mxu0 0.0
        %1098 = vmatpush2.msra.mxu0 0.0
        %1099 = vmatprep.subr.mxu0 0.0
        %1100 = vmatpush2.msra.mxu0 0.0
        %1101 = vmatprep.subr.mxu0 0.0
        %1102 = vmatpush2.msra.mxu0 0.0
        %1103 = vmatprep.subr.mxu0 0.0
        %1104 = vmatpush2.msra.mxu0 0.0
        %1105 = vmatprep.subr.mxu0 0.0
        %1106 = vmatpush2.msra.mxu0 0.0
        %1107 = vmatprep.subr.mxu0 0.0
        %1108 = vmatpush2.msra.mxu0 0.0
        %1109 = vmatprep.subr.mxu0 0.0
        %1110 = vmatpush2.msra.mxu0 0.0
        %1111 = vmatprep.subr.mxu0 0.0
        %1112 = vmatpush2.msra.mxu0 0.0
        %1113 = vmatprep.subr.mxu0 0.0
        %1114 = vmatpush2.msra.mxu0 0.0
        %1115 = vmatprep.subr.mxu0 0.0
        %1116 = vmatpush2.msra.mxu0 0.0
        %1117 = vmatprep.subr.mxu0 0.0
        %1118 = vmatpush2.msra.mxu0 0.0
        %1119 = vmatprep.subr.mxu0 0.0
        %1120 = vmatpush2.msra.mxu0 0.0
        %1121 = vmatprep.mubr.f32.mxu0 0.0
        %1122 = vmatmul.mubr.f32.gmra.mxu0 %v1055
        %v1123 = vpop.f32.mrf.mxu0
        %v1124 = vadd.f32 %v1052, %v1123
        %v1125 = vpop.f32.mrf.mxu0
        %v1126 = vadd.f32 %v1052, %v1125
        %1127 = vdwg.mxu0
        %v1130 = vcombine.low %v1124, %v1126
        %v1132 = vunpack.c.l.s4 1983009808
        %v1133 = vunpack.c.0.s8 %v1132
        %v1134 = vlaneseq
        %v1135 = vshrl.u32 %v1134, 7
        %v1136 = vsub.s32 %v1133, %v1135
        %v1137 = vrot.slane %v1130, %v1136
        %1139 = vst [vmem:[%s383] sm:$0xf] %v1137
        %s1140 = sand.u32 %s249, 1
        %s1141 = scalar_lea.sflag [#allocation4], %s1140
        %s1142 = sand.u32 %s249, 1
        %s1143 = smul.addr %s1142, 4
        %s1144 = scalar_lea.vmem [#allocation7], %s1143
        // Predicated region
        $region69: #{tpu_custom_call.1} parent=59 // pred_check
          %p1145 = pneg %p259
        $region70: #{tpu_custom_call.1} parent=59 // pred_check_branch
          %1147 = sbr.rel (%p1145) target = $region72
        $region71: #{tpu_custom_call.1} parent=59 // pred_region
          %s1148 = smul.u32 2, %s26
          %s1150 = ssub.s32 64, 64
          %1151 = vsyncadd %s1141, %s1150
          %s1152 = smul.addr %s1148, 32
          %s1153 = scalar_lea.hbm %s10, %s1152
          %s1155 = sshll.u32 %s1144, 4
          %s1156 = int_to_ptr.vmem [resolvable:$true] %s1155
          %1158 = dma.vmem_to_hbm [thread:$0]  %s1156, 64, %s1153, %s1141
        $region72: #{tpu_custom_call.1} parent=59 // pred_fallthru
          _
      $region60: #{tpu_custom_call.1} parent=5 // pred_fallthru
        _
      %p1159 = scmp.le.s32.totalorder 2, %s21
      // Predicated region
      $region73: #{tpu_custom_call.1} parent=5 // pred_check
        %p1160 = pneg %p1159
      $region74: #{tpu_custom_call.1} parent=5 // pred_check_branch
        %1162 = sbr.rel (%p1160) target = $region76
      $region75: #{tpu_custom_call.1} parent=5 // pred_region
        %s1163 = ssub.s32 %s21, 2
        // Predicated region
        $region77: #{tpu_custom_call.1} parent=75 // pred_check
          %p1164 = pneg %p265
        $region78: #{tpu_custom_call.1} parent=75 // pred_check_branch
          %1166 = sbr.rel (%p1164) target = $region80
        $region79: #{tpu_custom_call.1} parent=75 // pred_region
          %s1167 = sand.u32 %s250, 1
          %s1168 = scalar_lea.sflag [#allocation4], %s1167
          %s1169 = sand.u32 %s250, 1
          %s1170 = smul.addr %s1169, 4
          %s1171 = scalar_lea.vmem [#allocation7], %s1170
          %1172 = dma.done %s1168, 64
        $region80: #{tpu_custom_call.1} parent=75 // pred_fallthru
          _
      $region76: #{tpu_custom_call.1} parent=5 // pred_fallthru
        _
    $region6: #{tpu_custom_call.1} parent=1 // loop_footer
      %s25 = sadd.s32 1, %s21
    $region7: #{tpu_custom_call.1} parent=1 // loop_footer_branch
      %20 = sbr.rel target = $region3
    $region8: #{tpu_custom_call.1} parent=1 // loop_exit
      _
    %1173 = vsyncpa [#allocation3], 1
    %s1174 = scalar_lea.sflag [#allocation3], 1
    %1175 = vsyncpa %s1174, 1
    %1176 = vsyncpa [#allocation6], 1
    %1177 = vsyncpa [#allocation4], 1
    %s1178 = scalar_lea.sflag [#allocation4], 1
    %1179 = vsyncpa %s1178, 1

</llo_original>
